<compile_context>
chip_gen: v7x
topology: tpu7x:2x2x1
jax: 0.10.0
libtpu: 0.0.40
codegen_flags: <defaults>
</compile_context>

<pallas_src>
import jax
import jax.numpy as jnp
from jax.experimental import pallas as pl
from jax.experimental.pallas import tpu as pltpu

_LANE = 128
_SUBLANE = 8


def cross_network_kernel(x_ref, w_ref, b_ref, o_ref):
    # x_ref : (tb, Dp)        io dtype
    # w_ref : (L, Dp, 128)    bf16  (block-diagonal / lane-replicated weights)
    # b_ref : (L, Dp)         f32
    # o_ref : (tb, Dp)        io dtype
    tb, Dp = x_ref.shape
    num_layers = w_ref.shape[0]
    rep = Dp // _LANE

    x0 = x_ref[...].astype(jnp.float32)
    b_all = b_ref[...]                      # (L, Dp), small, loaded once
    x = x0
    # num_layers is small and static -> unrolled python loop.
    for i in range(num_layers):
        # Row-dot on the MXU.  The rhs is constructed so the per-row scalar
        # (per packed sub-row scalar in the packed layout) arrives already
        # replicated across lanes: no XLU lane-reduce needed.
        xw = jnp.dot(x.astype(jnp.bfloat16), w_ref[i],
                     preferred_element_type=jnp.float32)        # (tb, 128)
        if rep > 1:
            # Non-packed Dp > 128: every lane of xw holds the same dot;
            # lane-broadcast column 0 back to the full width.
            xw = jnp.broadcast_to(xw[:, :1], (tb, Dp))
        x = x0 * xw + b_all[i][None, :] + x
    o_ref[...] = x.astype(o_ref.dtype)


def _round_up(v, m):
    return (v + m - 1) // m * m


def _cdiv(a, b):
    return (a + b - 1) // b


def cross_network(x, w_stack, b_stack, *, tb=None, io_dtype=jnp.bfloat16,
                  vmem_limit_bytes=None):
    """x: (B, D); w_stack, b_stack: (L, D).  Returns (B, D) in x.dtype."""
    B, D = x.shape
    L, Dw = w_stack.shape
    assert Dw == D and b_stack.shape == (L, D)
    orig_dtype = x.dtype
    io_bytes = jnp.dtype(io_dtype).itemsize

    # ---------- layout: lane packing (small D) or lane padding --------------
    if D < _LANE and _LANE % D == 0:
        # Pack r = 128/D batch rows per lane-row -> zero padded-lane traffic.
        r = _LANE // D
        Dp = _LANE
        rows = _cdiv(B, r)
        pad_b = rows * r - B
        x_k = jnp.pad(x, ((0, pad_b), (0, 0))) if pad_b else x
        x_k = x_k.reshape(rows, Dp)
        # Block-diagonal rhs: W[l, p*D+k, q*D+j] = (p==q) * w[l, k]
        eye_r = jnp.eye(r, dtype=jnp.float32)
        w_blk = jnp.broadcast_to(w_stack.astype(jnp.float32)[:, :, None], (L, D, D))
        w_mat = jnp.einsum('pq,lkj->lpkqj', eye_r, w_blk).reshape(L, Dp, Dp)
        b_k = jnp.tile(b_stack.astype(jnp.float32), (1, r))          # (L, 128)
    else:
        r = 1
        Dp = _round_up(D, _LANE)
        rows = B
        if Dp != D:
            x_k = jnp.pad(x, ((0, 0), (0, Dp - D)))
            w_pad = jnp.pad(w_stack, ((0, 0), (0, Dp - D)))
            b_k = jnp.pad(b_stack, ((0, 0), (0, Dp - D))).astype(jnp.float32)
        else:
            x_k = x
            w_pad = w_stack
            b_k = b_stack.astype(jnp.float32)
        # Lane-replicated rhs, width capped at 128 lanes: MXU cost stays at
        # 2*L*Dp*128 flops/row regardless of Dp (v5e roofline note).
        w_mat = jnp.broadcast_to(w_pad.astype(jnp.float32)[:, :, None],
                                 (L, Dp, _LANE))
    # TODO(synk): for very large L*Dp, build w_mat in a VMEM scratch under
    # pl.when(program_id==0) from the raw (L, D) weights instead of
    # materializing (L, Dp, 128) in HBM (negligible at Dp=128).
    w_mat = w_mat.astype(jnp.bfloat16)
    x_k = x_k.astype(io_dtype)

    rows_p = _round_up(max(rows, _SUBLANE), _SUBLANE)
    if rows_p != rows:
        x_k = jnp.pad(x_k, ((0, rows_p - rows), (0, 0)))

    # ---------- tile sizing: generation-aware VMEM budget --------------------
    try:
        vmem_cap = int(pltpu.get_tpu_info().vmem_capacity_bytes)
    except Exception:
        vmem_cap = 64 * 1024 * 1024          # conservative (v7x per-core)
    budget = min(vmem_cap // 2, 32 * 1024 * 1024)

    rhs_n = w_mat.shape[-1]                  # always 128
    param_bytes = L * Dp * rhs_n * 2 + L * Dp * 4
    single_buffer_params = param_bytes >= (2 << 20)   # only matters when big
    fixed = (1 if single_buffer_params else 2) * param_bytes
    # double-buffered io tiles (x in, out) + in-kernel f32 working set
    per_row = 2 * 2 * Dp * io_bytes + 5 * Dp * 4

    if tb is None:
        tb = 2048                            # >= 512 KiB/tile at Dp=128 bf16
    max_tb = max(_SUBLANE,
                 ((budget - fixed) // max(per_row, 1)) // _SUBLANE * _SUBLANE)
    tb = int(min(_round_up(tb, _SUBLANE), max_tb, rows_p))
    tb = max(tb, _SUBLANE)

    # v7x megacore: prefer an even number of grid steps so the two TensorCores
    # split the parallel axis evenly (harmless on single-core v5e/v6e).
    steps = _cdiv(rows_p, tb)
    if steps > 1 and steps % 2 == 1:
        steps += 1
        tb = max(_SUBLANE, _round_up(_cdiv(rows_p, steps), _SUBLANE))
    elif steps == 1 and rows_p * Dp * io_bytes >= (1 << 20):
        tb = max(_SUBLANE, _round_up(_cdiv(rows_p, 2), _SUBLANE))
    grid = (_cdiv(rows_p, tb),)

    if vmem_limit_bytes is None:
        need = fixed + per_row * tb + (4 << 20)       # + compiler headroom
        vmem_limit_bytes = int(min(max(need, 16 << 20), 3 * vmem_cap // 4))

    cost = pl.CostEstimate(
        flops=int(2 * rows_p * L * Dp * rhs_n),
        transcendentals=0,
        bytes_accessed=int(2 * rows_p * Dp * io_bytes + param_bytes))

    def _param_spec(shape, index_map):
        if single_buffer_params:
            # Resident, never-refetched params: skip the second pipeline buffer.
            return pl.BlockSpec(shape, index_map, pipeline_mode=pl.Buffered(1))
        return pl.BlockSpec(shape, index_map)

    out = pl.pallas_call(
        cross_network_kernel,
        out_shape=jax.ShapeDtypeStruct((rows_p, Dp), io_dtype),
        grid_spec=pltpu.PrefetchScalarGridSpec(
            num_scalar_prefetch=0,
            grid=grid,
            in_specs=[
                pl.BlockSpec((tb, Dp), lambda i: (i, 0)),            # x tile
                _param_spec((L, Dp, rhs_n), lambda i: (0, 0, 0)),    # weights
                _param_spec((L, Dp), lambda i: (0, 0)),              # biases
            ],
            out_specs=pl.BlockSpec((tb, Dp), lambda i: (i, 0)),
        ),
        compiler_params=pltpu.CompilerParams(
            dimension_semantics=("parallel",),
            vmem_limit_bytes=int(vmem_limit_bytes),
        ),
        cost_estimate=cost,
    )(x_k, w_mat, b_k)

    # ---------- unpack / unpad ----------------------------------------------
    if r > 1:
        out = out[:rows].reshape(rows * r, D)
        if rows * r != B:
            out = out[:B]
    else:
        if rows_p != B or Dp != D:
            out = out[:B, :D]
    return out.astype(orig_dtype)


def cross_network_ref(x, w_stack, b_stack):
    """Pure-f32 JAX reference mirroring the PyTorch forward."""
    x0 = x
    out = x
    for i in range(w_stack.shape[0]):
        xw = jnp.sum(out * w_stack[i][None, :], axis=-1, keepdims=True)
        out = x0 * xw + b_stack[i][None, :] + out
    return out


def cross_network_matched_ref(x, w_stack, b_stack, io_dtype):
    """Reference mirroring the kernel's dtype strategy (io rounding, bf16 MXU
    operands, f32 accumulation, io-dtype output) for a tight comparison."""
    w = w_stack.astype(jnp.bfloat16).astype(jnp.float32)
    x0 = x.astype(io_dtype).astype(jnp.float32)
    out = x0
    for i in range(w_stack.shape[0]):
        xi = out.astype(jnp.bfloat16).astype(jnp.float32)
        xw = jnp.sum(xi * w[i][None, :], axis=-1, keepdims=True)
        out = x0 * xw + b_stack[i][None, :] + out
    return out.astype(io_dtype).astype(jnp.float32)


if __name__ == "__main__":
    key = jax.random.PRNGKey(0)
    keys = jax.random.split(key, 6)

    def run_case(batch, input_dim, num_layers, ks):
        kx, kw, kb = ks
        x = jax.random.normal(kx, (batch, input_dim), dtype=jnp.float32)
        # nn.Linear(input_dim, 1, bias=False)-style init for the cross weights.
        bound = 1.0 / (input_dim ** 0.5)
        w_stack = jax.random.uniform(kw, (num_layers, input_dim),
                                     dtype=jnp.float32, minval=-bound, maxval=bound)
        # Module inits biases to zero; use small nonzero values to exercise them.
        b_stack = 0.1 * jax.random.normal(kb, (num_layers, input_dim),
                                          dtype=jnp.float32)
        ref = cross_network_ref(x, w_stack, b_stack)
        for io_dtype in (jnp.float32, jnp.bfloat16):
            out = cross_network(x, w_stack, b_stack, io_dtype=io_dtype)
            out = jax.block_until_ready(out)
            assert out.shape == (batch, input_dim)
            matched = cross_network_matched_ref(x, w_stack, b_stack, io_dtype)
            # Tight check vs a reference using the same dtype strategy.
            assert jnp.allclose(out, matched, atol=1e-2, rtol=1e-2), \
                (batch, input_dim, str(io_dtype))
            # Looser check vs the exact f32 PyTorch-semantics reference.
            assert jnp.allclose(out, ref, atol=1e-1, rtol=1e-1), \
                (batch, input_dim, str(io_dtype))

    # Packed small-D path (the _donggun case: input_dim = num_fields * embed_dim).
    run_case(batch=8, input_dim=32, num_layers=3, ks=keys[:3])
    # Padded / lane-broadcast path (D > 128, not a multiple of 128, ragged batch).
    run_case(batch=24, input_dim=160, num_layers=2, ks=keys[3:])

    print("KERNEL_OK")
</pallas_src>

<mosaic_0001>
module attributes {stable_mosaic.version = 11 : i64} {
  func.func @cross_network_kernel(%arg0: i32, %arg1: memref<8x128xf32, #tpu.memory_space<vmem>>, %arg2: memref<3x128x128xbf16, #tpu.memory_space<vmem>>, %arg3: memref<3x128xf32, #tpu.memory_space<vmem>>, %arg4: memref<8x128xf32, #tpu.memory_space<vmem>>) attributes {dimension_semantics = [#tpu.dimension_semantics<parallel>], iteration_bounds = array<i64: 1>, scalar_prefetch = 0 : i64, scratch_operands = 0 : i64, tpu.core_type = #tpu.core_type<tc>, window_params = [{transform_indices = @transform_0, window_bounds = array<i64: 8, 128>}, {pipeline_mode = #tpu.pipeline_mode<synchronous>, transform_indices = @transform_1, window_bounds = array<i64: 3, 128, 128>}, {pipeline_mode = #tpu.pipeline_mode<synchronous>, transform_indices = @transform_2, window_bounds = array<i64: 3, 128>}, {transform_indices = @transform_3, window_bounds = array<i64: 8, 128>}]} {
    %c0 = arith.constant 0 : index
    %c0_0 = arith.constant 0 : index
    %0 = vector.load %arg1[%c0, %c0_0] : memref<8x128xf32, #tpu.memory_space<vmem>>, vector<8x128xf32>
    %c0_1 = arith.constant 0 : index
    %c0_2 = arith.constant 0 : index
    %1 = vector.load %arg3[%c0_1, %c0_2] : memref<3x128xf32, #tpu.memory_space<vmem>>, vector<3x128xf32>
    %2 = arith.truncf %0 : vector<8x128xf32> to vector<8x128xbf16>
    %c0_3 = arith.constant 0 : index
    %c0_4 = arith.constant 0 : index
    %c0_5 = arith.constant 0 : index
    %3 = vector.load %arg2[%c0_3, %c0_4, %c0_5] : memref<3x128x128xbf16, #tpu.memory_space<vmem>>, vector<1x128x128xbf16>
    %4 = vector.shape_cast %3 : vector<1x128x128xbf16> to vector<128x128xbf16>
    %cst = arith.constant dense<0.000000e+00> : vector<8x128xf32>
    %5 = tpu.matmul %2, %4, %cst {dimension_numbers = #tpu.dot_dimension_numbers<[1], [0], [0], [1], [0, 0, 1, 1], [], []>} : vector<8x128xbf16>, vector<128x128xbf16>, vector<8x128xf32> -> vector<8x128xf32>
    %6 = arith.mulf %0, %5 : vector<8x128xf32>
    %7 = vector.extract_strided_slice %1 {offsets = [0, 0], sizes = [1, 128], strides = [1, 1]} : vector<3x128xf32> to vector<1x128xf32>
    %8 = vector.shape_cast %7 : vector<1x128xf32> to vector<128xf32>
    %9 = vector.shape_cast %8 : vector<128xf32> to vector<1x128xf32>
    %10 = vector.broadcast %9 : vector<1x128xf32> to vector<8x128xf32>
    %11 = arith.addf %6, %10 : vector<8x128xf32>
    %12 = arith.addf %11, %0 : vector<8x128xf32>
    %13 = arith.truncf %12 : vector<8x128xf32> to vector<8x128xbf16>
    %c1 = arith.constant 1 : index
    %c0_6 = arith.constant 0 : index
    %c0_7 = arith.constant 0 : index
    %14 = vector.load %arg2[%c1, %c0_6, %c0_7] : memref<3x128x128xbf16, #tpu.memory_space<vmem>>, vector<1x128x128xbf16>
    %15 = vector.shape_cast %14 : vector<1x128x128xbf16> to vector<128x128xbf16>
    %cst_8 = arith.constant dense<0.000000e+00> : vector<8x128xf32>
    %16 = tpu.matmul %13, %15, %cst_8 {dimension_numbers = #tpu.dot_dimension_numbers<[1], [0], [0], [1], [0, 0, 1, 1], [], []>} : vector<8x128xbf16>, vector<128x128xbf16>, vector<8x128xf32> -> vector<8x128xf32>
    %17 = arith.mulf %0, %16 : vector<8x128xf32>
    %18 = vector.extract_strided_slice %1 {offsets = [1, 0], sizes = [1, 128], strides = [1, 1]} : vector<3x128xf32> to vector<1x128xf32>
    %19 = vector.shape_cast %18 : vector<1x128xf32> to vector<128xf32>
    %20 = vector.shape_cast %19 : vector<128xf32> to vector<1x128xf32>
    %21 = vector.broadcast %20 : vector<1x128xf32> to vector<8x128xf32>
    %22 = arith.addf %17, %21 : vector<8x128xf32>
    %23 = arith.addf %22, %12 : vector<8x128xf32>
    %24 = arith.truncf %23 : vector<8x128xf32> to vector<8x128xbf16>
    %c2 = arith.constant 2 : index
    %c0_9 = arith.constant 0 : index
    %c0_10 = arith.constant 0 : index
    %25 = vector.load %arg2[%c2, %c0_9, %c0_10] : memref<3x128x128xbf16, #tpu.memory_space<vmem>>, vector<1x128x128xbf16>
    %26 = vector.shape_cast %25 : vector<1x128x128xbf16> to vector<128x128xbf16>
    %cst_11 = arith.constant dense<0.000000e+00> : vector<8x128xf32>
    %27 = tpu.matmul %24, %26, %cst_11 {dimension_numbers = #tpu.dot_dimension_numbers<[1], [0], [0], [1], [0, 0, 1, 1], [], []>} : vector<8x128xbf16>, vector<128x128xbf16>, vector<8x128xf32> -> vector<8x128xf32>
    %28 = arith.mulf %0, %27 : vector<8x128xf32>
    %29 = vector.extract_strided_slice %1 {offsets = [2, 0], sizes = [1, 128], strides = [1, 1]} : vector<3x128xf32> to vector<1x128xf32>
    %30 = vector.shape_cast %29 : vector<1x128xf32> to vector<128xf32>
    %31 = vector.shape_cast %30 : vector<128xf32> to vector<1x128xf32>
    %32 = vector.broadcast %31 : vector<1x128xf32> to vector<8x128xf32>
    %33 = arith.addf %28, %32 : vector<8x128xf32>
    %34 = arith.addf %33, %23 : vector<8x128xf32>
    %c0_12 = arith.constant 0 : index
    %c0_13 = arith.constant 0 : index
    %35 = vector.load %arg4[%c0_12, %c0_13] : memref<8x128xf32, #tpu.memory_space<vmem>>, vector<8x128xf32>
    tpu.vector_store %arg4[%c0_12, %c0_13], %34 {strides = array<i32>} : memref<8x128xf32, #tpu.memory_space<vmem>>, vector<8x128xf32>,
    return
  }
  func.func @transform_0(%arg0: i32) -> (i32, i32) {
    %c0_i32 = arith.constant 0 : i32
    %c0_i32_0 = arith.constant 0 : i32
    return %arg0, %c0_i32 : i32, i32
  }
  func.func @transform_1(%arg0: i32) -> (i32, i32, i32) {
    %c0_i32 = arith.constant 0 : i32
    %c0_i32_0 = arith.constant 0 : i32
    %c0_i32_1 = arith.constant 0 : i32
    %c0_i32_2 = arith.constant 0 : i32
    return %c0_i32, %c0_i32_0, %c0_i32_1 : i32, i32, i32
  }
  func.func @transform_2(%arg0: i32) -> (i32, i32) {
    %c0_i32 = arith.constant 0 : i32
    %c0_i32_0 = arith.constant 0 : i32
    %c0_i32_1 = arith.constant 0 : i32
    return %c0_i32, %c0_i32_0 : i32, i32
  }
  func.func @transform_3(%arg0: i32) -> (i32, i32) {
    %c0_i32 = arith.constant 0 : i32
    %c0_i32_0 = arith.constant 0 : i32
    return %arg0, %c0_i32 : i32, i32
  }
}

</mosaic_0001>

<llo_original>
// kernel: tpu_custom_call.1
$region0: #{tpu_custom_call.1}
  #allocation0 [shape = 'u32[]', space=smem, size = 0x4, offset = 0x4, fixed_abs, tag = 'smem constant byte address 0x4 - core index']
  #allocation1 [shape = 'u32[144,128]{1,0:T(1,128)}', space=vmem, size = 0x12000, scoped, tag = 'internal scratch']
  %s0 = inlined_call_operand.hbm [shape: f32[8,128], index: 0, kind: input, shape index: {}]
  %s1 = inlined_call_operand.hbm [shape: bf16[3,128,128], index: 1, kind: input, shape index: {}]
  %s2 = inlined_call_operand.vmem [shape: f32[3,128], index: 2, kind: input, shape index: {}]
  %s3 = inlined_call_operand.hbm [shape: f32[8,128], index: 3, kind: output, shape index: {}]
  %s4 = sld [smem:[#allocation0]]
  $region30: #{tpu_custom_call.1} parent=0
    _
  %s6 = ssub.s32 1, %s4
  %s7 = scalar_select 0, %s6, %s4
  $region1: #{tpu_custom_call.1} parent=0
    #allocation2 [shape = 'u8[4096]{0}', space=vmem, size = 0x1000, scoped, tag = 'input window, operand 0, single buffered']
    #allocation3 [shape = 's32[1]{0}', space=sflag, size = 0x4, scoped, tag = 'scoped memory for tpu_custom_call.1']
    #allocation4 [shape = 's32[1]{0}', space=sflag, size = 0x4, scoped, tag = 'scoped memory for tpu_custom_call.1']
    #allocation5 [shape = 'u8[98304]{0}', space=vmem, size = 0x18000, scoped, tag = 'input window, operand 1, single buffered']
    #allocation6 [shape = 's32[1]{0}', space=sflag, size = 0x4, scoped, tag = 'scoped memory for tpu_custom_call.1']
    #allocation7 [shape = 'u8[4096]{0}', space=vmem, size = 0x1000, scoped, tag = 'output window, operand 0, single buffered']
    %8 = vsyncpa [#allocation3], 0
    %9 = vsyncpa [#allocation6], 0
    %10 = vsyncpa [#allocation4], 0
    // Predicated region
    $region2: #{tpu_custom_call.1} parent=1 // pred_check
      _
    $region3: #{tpu_custom_call.1} parent=1 // pred_check_branch
      %12 = sbr.rel (0) target = $region5
    $region4: #{tpu_custom_call.1} parent=1 // pred_region
      %s14 = ssub.s32 128, 128
      %15 = vsyncadd [#allocation3], %s14
      %s17 = sshll.u32 [#allocation2], 4
      %s18 = int_to_ptr.vmem [resolvable:$true] %s17
      %20 = dma.hbm_to_vmem [thread:$0]  %s0, 128, %s18, [#allocation3]
    $region5: #{tpu_custom_call.1} parent=1 // pred_fallthru
      _
    // Predicated region
    $region6: #{tpu_custom_call.1} parent=1 // pred_check
      _
    $region7: #{tpu_custom_call.1} parent=1 // pred_check_branch
      %22 = sbr.rel (0) target = $region9
    $region8: #{tpu_custom_call.1} parent=1 // pred_region
      %s24 = ssub.s32 3072, 3072
      %25 = vsyncadd [#allocation6], %s24
      %s26 = sshll.u32 [#allocation5], 4
      %s27 = int_to_ptr.vmem [resolvable:$true] %s26
      %32 = dma.hbm_to_vmem [thread:$0]  %s1, 3072, %s27, [#allocation6], 64, 64, 4
    $region9: #{tpu_custom_call.1} parent=1 // pred_fallthru
      _
    // Predicated region
    $region10: #{tpu_custom_call.1} parent=1 // pred_check
      _
    $region11: #{tpu_custom_call.1} parent=1 // pred_check_branch
      %34 = sbr.rel (0) target = $region13
    $region12: #{tpu_custom_call.1} parent=1 // pred_region
      _
    $region13: #{tpu_custom_call.1} parent=1 // pred_fallthru
      _
    // Predicated region
    $region14: #{tpu_custom_call.1} parent=1 // pred_check
      _
    $region15: #{tpu_custom_call.1} parent=1 // pred_check_branch
      %36 = sbr.rel (0) target = $region17
    $region16: #{tpu_custom_call.1} parent=1 // pred_region
      %37 = dma.done [#allocation3], 128
    $region17: #{tpu_custom_call.1} parent=1 // pred_fallthru
      _
    // Predicated region
    $region18: #{tpu_custom_call.1} parent=1 // pred_check
      _
    $region19: #{tpu_custom_call.1} parent=1 // pred_check_branch
      %39 = sbr.rel (0) target = $region21
    $region20: #{tpu_custom_call.1} parent=1 // pred_region
      %40 = dma.done [#allocation6], 3072
    $region21: #{tpu_custom_call.1} parent=1 // pred_fallthru
      _
    %v42 = vld [vmem:[#allocation2] sm:$0xff]
    %v43 = vld [vmem:[%s2] sm:$0x7]
    %v44 = vpack.c.bf16 %v42, %v42
    %v45 = vld [vmem:[#allocation5] sm:$0xf]
    %v46 = vld [vmem:[#allocation5 + $0x4] sm:$0xf]
    %v47 = vld [vmem:[#allocation5 + $0x8] sm:$0xf]
    %v48 = vld [vmem:[#allocation5 + $0xc] sm:$0xf]
    %v49 = vld [vmem:[#allocation5 + $0x10] sm:$0xf]
    %v50 = vld [vmem:[#allocation5 + $0x14] sm:$0xf]
    %v51 = vld [vmem:[#allocation5 + $0x18] sm:$0xf]
    %v52 = vld [vmem:[#allocation5 + $0x1c] sm:$0xf]
    %v53 = vld [vmem:[#allocation5 + $0x20] sm:$0xf]
    %v54 = vld [vmem:[#allocation5 + $0x24] sm:$0xf]
    %v55 = vld [vmem:[#allocation5 + $0x28] sm:$0xf]
    %v56 = vld [vmem:[#allocation5 + $0x2c] sm:$0xf]
    %v57 = vld [vmem:[#allocation5 + $0x30] sm:$0xf]
    %v58 = vld [vmem:[#allocation5 + $0x34] sm:$0xf]
    %v59 = vld [vmem:[#allocation5 + $0x38] sm:$0xf]
    %v60 = vld [vmem:[#allocation5 + $0x3c] sm:$0xf]
    %v77 = vunpack.c.l.b16 %v45
    %v78 = vunpack.c.l.b16 %v46
    %v79 = vunpack.c.l.b16 %v47
    %v80 = vunpack.c.l.b16 %v48
    %v81 = vunpack.c.l.b16 %v49
    %v82 = vunpack.c.l.b16 %v50
    %v83 = vunpack.c.l.b16 %v51
    %v84 = vunpack.c.l.b16 %v52
    %v85 = vunpack.c.l.b16 %v53
    %v86 = vunpack.c.l.b16 %v54
    %v87 = vunpack.c.l.b16 %v55
    %v88 = vunpack.c.l.b16 %v56
    %v89 = vunpack.c.l.b16 %v57
    %v90 = vunpack.c.l.b16 %v58
    %v91 = vunpack.c.l.b16 %v59
    %v92 = vunpack.c.l.b16 %v60
    %v93 = vpack.c.b16 %v78, %v77
    %v94 = vpack.c.b16 %v80, %v79
    %v95 = vpack.c.b16 %v82, %v81
    %v96 = vpack.c.b16 %v84, %v83
    %v97 = vpack.c.b16 %v86, %v85
    %v98 = vpack.c.b16 %v88, %v87
    %v99 = vpack.c.b16 %v90, %v89
    %v100 = vpack.c.b16 %v92, %v91
    %109 = vmatprep.subr.bf16.mxu0 0
    %110 = vmatpush1.bf16.msra.mxu0 %v93
    %111 = vmatprep.subr.bf16.mxu0 0
    %112 = vmatpush1.bf16.msra.mxu0 %v94
    %113 = vmatprep.subr.bf16.mxu0 0
    %114 = vmatpush1.bf16.msra.mxu0 %v95
    %115 = vmatprep.subr.bf16.mxu0 0
    %116 = vmatpush1.bf16.msra.mxu0 %v96
    %117 = vmatprep.subr.bf16.mxu0 0
    %118 = vmatpush1.bf16.msra.mxu0 %v97
    %119 = vmatprep.subr.bf16.mxu0 0
    %120 = vmatpush1.bf16.msra.mxu0 %v98
    %121 = vmatprep.subr.bf16.mxu0 0
    %122 = vmatpush1.bf16.msra.mxu0 %v99
    %123 = vmatprep.subr.bf16.mxu0 0
    %124 = vmatpush1.bf16.msra.mxu0 %v100
    %125 = vmatprep.subr.bf16.mxu0 0
    %126 = vmatpush1.bf16.msra.mxu0 0
    %127 = vmatprep.subr.bf16.mxu0 0
    %128 = vmatpush1.bf16.msra.mxu0 0
    %129 = vmatprep.subr.bf16.mxu0 0
    %130 = vmatpush1.bf16.msra.mxu0 0
    %131 = vmatprep.subr.bf16.mxu0 0
    %132 = vmatpush1.bf16.msra.mxu0 0
    %133 = vmatprep.subr.bf16.mxu0 0
    %134 = vmatpush1.bf16.msra.mxu0 0
    %135 = vmatprep.subr.bf16.mxu0 0
    %136 = vmatpush1.bf16.msra.mxu0 0
    %137 = vmatprep.subr.bf16.mxu0 0
    %138 = vmatpush1.bf16.msra.mxu0 0
    %139 = vmatprep.subr.bf16.mxu0 0
    %140 = vmatpush1.bf16.msra.mxu0 0
    %141 = vmatprep.mubr.bf16.mxu0 0
    %142 = vmatmul.mubr.bf16.gmra.mrb[0].mxu0 %v44
    %v143 = vpop.f32.mrb[0].mxu0
    %v144 = vadd.f32 0.0, %v143
    %v145 = vpop.f32.mrb[0].mxu0
    %v146 = vpop.f32.mrb[0].mxu0
    %v147 = vpop.f32.mrb[0].mxu0
    %148 = vdwg.mxu0
    %v149 = vmul.f32 %v42, %v144
    %v150 = vlaneseq
    %v151 = vshrl.u32 %v150, 7
    %v152 = vsub.s32 0, %v151
    %v153 = vrot.slane %v43, %v152
    %v154 = vadd.f32 %v149, %v153
    %v155 = vadd.f32 %v154, %v42
    %v156 = vpack.c.bf16 %v155, %v155
    %s157 = scalar_lea.vmem [#allocation5], 64
    %v158 = vld [vmem:[%s157] sm:$0xf]
    %v159 = vld [vmem:[%s157 + $0x4] sm:$0xf]
    %v160 = vld [vmem:[%s157 + $0x8] sm:$0xf]
    %v161 = vld [vmem:[%s157 + $0xc] sm:$0xf]
    %v162 = vld [vmem:[%s157 + $0x10] sm:$0xf]
    %v163 = vld [vmem:[%s157 + $0x14] sm:$0xf]
    %v164 = vld [vmem:[%s157 + $0x18] sm:$0xf]
    %v165 = vld [vmem:[%s157 + $0x1c] sm:$0xf]
    %v166 = vld [vmem:[%s157 + $0x20] sm:$0xf]
    %v167 = vld [vmem:[%s157 + $0x24] sm:$0xf]
    %v168 = vld [vmem:[%s157 + $0x28] sm:$0xf]
    %v169 = vld [vmem:[%s157 + $0x2c] sm:$0xf]
    %v170 = vld [vmem:[%s157 + $0x30] sm:$0xf]
    %v171 = vld [vmem:[%s157 + $0x34] sm:$0xf]
    %v172 = vld [vmem:[%s157 + $0x38] sm:$0xf]
    %v173 = vld [vmem:[%s157 + $0x3c] sm:$0xf]
    %v190 = vunpack.c.l.b16 %v158
    %v191 = vunpack.c.l.b16 %v159
    %v192 = vunpack.c.l.b16 %v160
    %v193 = vunpack.c.l.b16 %v161
    %v194 = vunpack.c.l.b16 %v162
    %v195 = vunpack.c.l.b16 %v163
    %v196 = vunpack.c.l.b16 %v164
    %v197 = vunpack.c.l.b16 %v165
    %v198 = vunpack.c.l.b16 %v166
    %v199 = vunpack.c.l.b16 %v167
    %v200 = vunpack.c.l.b16 %v168
    %v201 = vunpack.c.l.b16 %v169
    %v202 = vunpack.c.l.b16 %v170
    %v203 = vunpack.c.l.b16 %v171
    %v204 = vunpack.c.l.b16 %v172
    %v205 = vunpack.c.l.b16 %v173
    %v206 = vpack.c.b16 %v191, %v190
    %v207 = vpack.c.b16 %v193, %v192
    %v208 = vpack.c.b16 %v195, %v194
    %v209 = vpack.c.b16 %v197, %v196
    %v210 = vpack.c.b16 %v199, %v198
    %v211 = vpack.c.b16 %v201, %v200
    %v212 = vpack.c.b16 %v203, %v202
    %v213 = vpack.c.b16 %v205, %v204
    %222 = vmatprep.subr.bf16.mxu0 0
    %223 = vmatpush1.bf16.msra.mxu0 %v206
    %224 = vmatprep.subr.bf16.mxu0 0
    %225 = vmatpush1.bf16.msra.mxu0 %v207
    %226 = vmatprep.subr.bf16.mxu0 0
    %227 = vmatpush1.bf16.msra.mxu0 %v208
    %228 = vmatprep.subr.bf16.mxu0 0
    %229 = vmatpush1.bf16.msra.mxu0 %v209
    %230 = vmatprep.subr.bf16.mxu0 0
    %231 = vmatpush1.bf16.msra.mxu0 %v210
    %232 = vmatprep.subr.bf16.mxu0 0
    %233 = vmatpush1.bf16.msra.mxu0 %v211
    %234 = vmatprep.subr.bf16.mxu0 0
    %235 = vmatpush1.bf16.msra.mxu0 %v212
    %236 = vmatprep.subr.bf16.mxu0 0
    %237 = vmatpush1.bf16.msra.mxu0 %v213
    %238 = vmatprep.subr.bf16.mxu0 0
    %239 = vmatpush1.bf16.msra.mxu0 0
    %240 = vmatprep.subr.bf16.mxu0 0
    %241 = vmatpush1.bf16.msra.mxu0 0
    %242 = vmatprep.subr.bf16.mxu0 0
    %243 = vmatpush1.bf16.msra.mxu0 0
    %244 = vmatprep.subr.bf16.mxu0 0
    %245 = vmatpush1.bf16.msra.mxu0 0
    %246 = vmatprep.subr.bf16.mxu0 0
    %247 = vmatpush1.bf16.msra.mxu0 0
    %248 = vmatprep.subr.bf16.mxu0 0
    %249 = vmatpush1.bf16.msra.mxu0 0
    %250 = vmatprep.subr.bf16.mxu0 0
    %251 = vmatpush1.bf16.msra.mxu0 0
    %252 = vmatprep.subr.bf16.mxu0 0
    %253 = vmatpush1.bf16.msra.mxu0 0
    %254 = vmatprep.mubr.bf16.mxu0 0
    %255 = vmatmul.mubr.bf16.gmra.mrb[0].mxu0 %v156
    %v256 = vpop.f32.mrb[0].mxu0
    %v257 = vadd.f32 0.0, %v256
    %v258 = vpop.f32.mrb[0].mxu0
    %v259 = vpop.f32.mrb[0].mxu0
    %v260 = vpop.f32.mrb[0].mxu0
    %261 = vdwg.mxu0
    %v262 = vmul.f32 %v42, %v257
    %v263 = vlaneseq
    %v264 = vshrl.u32 %v263, 7
    %v265 = vsub.s32 1, %v264
    %v266 = vrot.slane %v43, %v265
    %v267 = vadd.f32 %v262, %v266
    %v268 = vadd.f32 %v267, %v155
    %v269 = vpack.c.bf16 %v268, %v268
    %s270 = scalar_lea.vmem [#allocation5], 128
    %v271 = vld [vmem:[%s270] sm:$0xf]
    %v272 = vld [vmem:[%s270 + $0x4] sm:$0xf]
    %v273 = vld [vmem:[%s270 + $0x8] sm:$0xf]
    %v274 = vld [vmem:[%s270 + $0xc] sm:$0xf]
    %v275 = vld [vmem:[%s270 + $0x10] sm:$0xf]
    %v276 = vld [vmem:[%s270 + $0x14] sm:$0xf]
    %v277 = vld [vmem:[%s270 + $0x18] sm:$0xf]
    %v278 = vld [vmem:[%s270 + $0x1c] sm:$0xf]
    %v279 = vld [vmem:[%s270 + $0x20] sm:$0xf]
    %v280 = vld [vmem:[%s270 + $0x24] sm:$0xf]
    %v281 = vld [vmem:[%s270 + $0x28] sm:$0xf]
    %v282 = vld [vmem:[%s270 + $0x2c] sm:$0xf]
    %v283 = vld [vmem:[%s270 + $0x30] sm:$0xf]
    %v284 = vld [vmem:[%s270 + $0x34] sm:$0xf]
    %v285 = vld [vmem:[%s270 + $0x38] sm:$0xf]
    %v286 = vld [vmem:[%s270 + $0x3c] sm:$0xf]
    %v303 = vunpack.c.l.b16 %v271
    %v304 = vunpack.c.l.b16 %v272
    %v305 = vunpack.c.l.b16 %v273
    %v306 = vunpack.c.l.b16 %v274
    %v307 = vunpack.c.l.b16 %v275
    %v308 = vunpack.c.l.b16 %v276
    %v309 = vunpack.c.l.b16 %v277
    %v310 = vunpack.c.l.b16 %v278
    %v311 = vunpack.c.l.b16 %v279
    %v312 = vunpack.c.l.b16 %v280
    %v313 = vunpack.c.l.b16 %v281
    %v314 = vunpack.c.l.b16 %v282
    %v315 = vunpack.c.l.b16 %v283
    %v316 = vunpack.c.l.b16 %v284
    %v317 = vunpack.c.l.b16 %v285
    %v318 = vunpack.c.l.b16 %v286
    %v319 = vpack.c.b16 %v304, %v303
    %v320 = vpack.c.b16 %v306, %v305
    %v321 = vpack.c.b16 %v308, %v307
    %v322 = vpack.c.b16 %v310, %v309
    %v323 = vpack.c.b16 %v312, %v311
    %v324 = vpack.c.b16 %v314, %v313
    %v325 = vpack.c.b16 %v316, %v315
    %v326 = vpack.c.b16 %v318, %v317
    %335 = vmatprep.subr.bf16.mxu0 0
    %336 = vmatpush1.bf16.msra.mxu0 %v319
    %337 = vmatprep.subr.bf16.mxu0 0
    %338 = vmatpush1.bf16.msra.mxu0 %v320
    %339 = vmatprep.subr.bf16.mxu0 0
    %340 = vmatpush1.bf16.msra.mxu0 %v321
    %341 = vmatprep.subr.bf16.mxu0 0
    %342 = vmatpush1.bf16.msra.mxu0 %v322
    %343 = vmatprep.subr.bf16.mxu0 0
    %344 = vmatpush1.bf16.msra.mxu0 %v323
    %345 = vmatprep.subr.bf16.mxu0 0
    %346 = vmatpush1.bf16.msra.mxu0 %v324
    %347 = vmatprep.subr.bf16.mxu0 0
    %348 = vmatpush1.bf16.msra.mxu0 %v325
    %349 = vmatprep.subr.bf16.mxu0 0
    %350 = vmatpush1.bf16.msra.mxu0 %v326
    %351 = vmatprep.subr.bf16.mxu0 0
    %352 = vmatpush1.bf16.msra.mxu0 0
    %353 = vmatprep.subr.bf16.mxu0 0
    %354 = vmatpush1.bf16.msra.mxu0 0
    %355 = vmatprep.subr.bf16.mxu0 0
    %356 = vmatpush1.bf16.msra.mxu0 0
    %357 = vmatprep.subr.bf16.mxu0 0
    %358 = vmatpush1.bf16.msra.mxu0 0
    %359 = vmatprep.subr.bf16.mxu0 0
    %360 = vmatpush1.bf16.msra.mxu0 0
    %361 = vmatprep.subr.bf16.mxu0 0
    %362 = vmatpush1.bf16.msra.mxu0 0
    %363 = vmatprep.subr.bf16.mxu0 0
    %364 = vmatpush1.bf16.msra.mxu0 0
    %365 = vmatprep.subr.bf16.mxu0 0
    %366 = vmatpush1.bf16.msra.mxu0 0
    %367 = vmatprep.mubr.bf16.mxu0 0
    %368 = vmatmul.mubr.bf16.gmra.mrb[0].mxu0 %v269
    %v369 = vpop.f32.mrb[0].mxu0
    %v370 = vadd.f32 0.0, %v369
    %v371 = vpop.f32.mrb[0].mxu0
    %v372 = vpop.f32.mrb[0].mxu0
    %v373 = vpop.f32.mrb[0].mxu0
    %374 = vdwg.mxu0
    %v375 = vmul.f32 %v42, %v370
    %v376 = vlaneseq
    %v377 = vshrl.u32 %v376, 7
    %v378 = vsub.s32 2, %v377
    %v379 = vrot.slane %v43, %v378
    %v380 = vadd.f32 %v375, %v379
    %v381 = vadd.f32 %v380, %v268
    %382 = vst [vmem:[#allocation7] sm:$0xff] %v381
    // Predicated region
    $region22: #{tpu_custom_call.1} parent=1 // pred_check
      _
    $region23: #{tpu_custom_call.1} parent=1 // pred_check_branch
      %384 = sbr.rel (0) target = $region25
    $region24: #{tpu_custom_call.1} parent=1 // pred_region
      %s386 = ssub.s32 128, 128
      %387 = vsyncadd [#allocation4], %s386
      %s389 = sshll.u32 [#allocation7], 4
      %s390 = int_to_ptr.vmem [resolvable:$true] %s389
      %392 = dma.vmem_to_hbm [thread:$0]  %s390, 128, %s3, [#allocation4]
    $region25: #{tpu_custom_call.1} parent=1 // pred_fallthru
      _
    // Predicated region
    $region26: #{tpu_custom_call.1} parent=1 // pred_check
      _
    $region27: #{tpu_custom_call.1} parent=1 // pred_check_branch
      %394 = sbr.rel (0) target = $region29
    $region28: #{tpu_custom_call.1} parent=1 // pred_region
      %395 = dma.done [#allocation4], 128
    $region29: #{tpu_custom_call.1} parent=1 // pred_fallthru
      _
    %396 = vsyncpa [#allocation3], 1
    %397 = vsyncpa [#allocation6], 1
    %398 = vsyncpa [#allocation4], 1

</llo_original>
